<compile_context>
chip_gen: v5e
topology: v5e:2x2
jax: 0.10.0
libtpu: 0.0.40
codegen_flags: <defaults>
</compile_context>

<pallas_src>
import functools

import numpy as np
import jax
import jax.numpy as jnp
from jax.experimental import pallas as pl
from jax.experimental.pallas import tpu as pltpu

_LANE = 128        # lane width: pad size_out to a multiple of this
_SUBLANE = 8       # sublane group: pad batch to a multiple of this
_BATCH_BLOCK = 256 # rows per grid step once the batch is tiled


def _round_up(n, m):
    return ((n + m - 1) // m) * m


# ---------------------------------------------------------------------------
# Host-side parameter construction (mirrors OcclusionFourthLayer.init_weights_bias)
# ---------------------------------------------------------------------------
def init_weights_bias(size_in, size_out, image):
    image = np.asarray(image, dtype=np.float32)
    image_flatten = image.reshape(-1)
    c, h, w = image.shape
    weights = np.zeros((size_out, size_in), dtype=np.float32)
    for channel in range(c):
        for i in range(size_out // c):
            weights[channel * h * w + i, i * 2] = 1.0
            weights[channel * h * w + i, i * 2 + 1] = -1.0
    bias = np.ones(size_out, dtype=np.float32) * image_flatten
    return weights, bias


# ---------------------------------------------------------------------------
# Kernels
# ---------------------------------------------------------------------------
def _matmul_bias_kernel(x_ref, wt_ref, b_ref, o_ref):
    """(Bm, K) @ (K, Npad) + (1, Npad) -> (Bm, Npad), fp32 accumulation."""
    w = wt_ref[...].astype(jnp.float32)          # no-op for fp32, cheap for bf16
    acc = jnp.dot(
        x_ref[...], w,
        preferred_element_type=jnp.float32,
        precision=jax.lax.Precision.HIGHEST,     # exact-ish fp32 for shrink weights
    )
    o_ref[...] = acc + b_ref[...]


def _structured_kernel(xe_ref, xo_ref, b_ref, o_ref, *, channels):
    """Non-shrink structured weights: out = tile_C(x_even - x_odd) + image_flat."""
    d = xe_ref[...] - xo_ref[...]                # (Bm, HWpad)   VPU only
    if channels > 1:
        d = jnp.concatenate([d] * channels, axis=-1)
    o_ref[...] = d + b_ref[...]


# ---------------------------------------------------------------------------
# pallas_call builders (no-grid for small B, parallel batch grid for large B)
# ---------------------------------------------------------------------------
def _full_spec(shape):
    return pl.BlockSpec(shape, lambda: (0,) * len(shape))


def _matmul_forward(x2, weights_t, bias_row):
    b_pad, k = x2.shape
    n_pad = weights_t.shape[1]
    use_grid = b_pad > _BATCH_BLOCK and b_pad % _BATCH_BLOCK == 0
    if not use_grid:
        return pl.pallas_call(
            _matmul_bias_kernel,
            out_shape=jax.ShapeDtypeStruct((b_pad, n_pad), jnp.float32),
            in_specs=[_full_spec((b_pad, k)),
                      _full_spec((k, n_pad)),
                      _full_spec((1, n_pad))],
            out_specs=_full_spec((b_pad, n_pad)),
        )(x2, weights_t, bias_row)
    nb = b_pad // _BATCH_BLOCK
    return pl.pallas_call(
        _matmul_bias_kernel,
        out_shape=jax.ShapeDtypeStruct((b_pad, n_pad), jnp.float32),
        grid=(nb,),
        in_specs=[
            pl.BlockSpec((_BATCH_BLOCK, k), lambda i: (i, 0)),
            pl.BlockSpec((k, n_pad), lambda i: (0, 0)),   # weights: VMEM-resident
            pl.BlockSpec((1, n_pad), lambda i: (0, 0)),   # bias:    VMEM-resident
        ],
        out_specs=pl.BlockSpec((_BATCH_BLOCK, n_pad), lambda i: (i, 0)),
        compiler_params=pltpu.CompilerParams(dimension_semantics=("parallel",)),
    )(x2, weights_t, bias_row)


def _structured_forward(xe, xo, bias_row, channels):
    b_pad, hw_pad = xe.shape
    n_pad = bias_row.shape[1]
    kernel = functools.partial(_structured_kernel, channels=channels)
    use_grid = b_pad > _BATCH_BLOCK and b_pad % _BATCH_BLOCK == 0
    if not use_grid:
        return pl.pallas_call(
            kernel,
            out_shape=jax.ShapeDtypeStruct((b_pad, n_pad), jnp.float32),
            in_specs=[_full_spec((b_pad, hw_pad)),
                      _full_spec((b_pad, hw_pad)),
                      _full_spec((1, n_pad))],
            out_specs=_full_spec((b_pad, n_pad)),
        )(xe, xo, bias_row)
    nb = b_pad // _BATCH_BLOCK
    return pl.pallas_call(
        kernel,
        out_shape=jax.ShapeDtypeStruct((b_pad, n_pad), jnp.float32),
        grid=(nb,),
        in_specs=[
            pl.BlockSpec((_BATCH_BLOCK, hw_pad), lambda i: (i, 0)),
            pl.BlockSpec((_BATCH_BLOCK, hw_pad), lambda i: (i, 0)),
            pl.BlockSpec((1, n_pad), lambda i: (0, 0)),
        ],
        out_specs=pl.BlockSpec((_BATCH_BLOCK, n_pad), lambda i: (i, 0)),
        compiler_params=pltpu.CompilerParams(dimension_semantics=("parallel",)),
    )(xe, xo, bias_row)


def _pad_batch(b):
    b_pad = _round_up(max(b, 1), _SUBLANE)
    if b_pad >= 2 * _BATCH_BLOCK:
        b_pad = _round_up(b, _BATCH_BLOCK)    # switch to the batch grid
    return b_pad


# ---------------------------------------------------------------------------
# Module factory (mirrors OcclusionFourthLayer.__init__ + forward)
# ---------------------------------------------------------------------------
def make_occlusion_fourth_layer(size_in, size_out, image,
                                first_layer_weight=None, first_layer_bias=None,
                                shrink=False, force_matmul=False):
    """Returns forward(x): (size_in,)->(n_out,) or (B, size_in)->(B, n_out)."""
    image = np.asarray(image, dtype=np.float32)
    c, h, wdt = image.shape
    weights, bias = init_weights_bias(size_in, size_out, image)
    if shrink:
        flw = np.asarray(first_layer_weight, dtype=np.float32)
        flb = np.asarray(first_layer_bias, dtype=np.float32)
        weights = flw @ weights
        bias = flb + flw @ bias
    n_out = weights.shape[0]

    hw = h * wdt
    use_fast = ((not shrink) and (not force_matmul)
                and size_out == c * hw and size_in >= 2 * hw)

    if use_fast:
        # -------- structured fast path: no weight operand, no MXU ----------
        hw_pad = _round_up(hw, _LANE)
        bias_pad = np.zeros((c, hw_pad), dtype=np.float32)
        bias_pad[:, :hw] = bias.reshape(c, hw)
        bias_row = jnp.asarray(bias_pad.reshape(1, c * hw_pad))

        @jax.jit
        def _fwd2d(x2):
            b = x2.shape[0]
            b_pad = _pad_batch(b)
            # TODO(synk): lane-stride-2 even/odd gather has no robust Mosaic
            # lowering; the pair deinterleave is done with XLA slicing here and
            # only the fused subtract/tile/bias-add runs in the Pallas kernel.
            pairs = x2[:, :2 * hw].reshape(b, hw, 2)
            pad = ((0, b_pad - b), (0, hw_pad - hw))
            xe = jnp.pad(pairs[:, :, 0], pad)
            xo = jnp.pad(pairs[:, :, 1], pad)
            out = _structured_forward(xe, xo, bias_row, c)
            return out.reshape(b_pad, c, hw_pad)[:b, :, :hw].reshape(b, c * hw)
    else:
        # -------- generic / shrink path: lane-dense padded matmul ----------
        # Non-shrink structured weights are exactly {-1,0,+1}: bf16 is lossless
        # and halves the weight DMA.  Shrink weights are arbitrary -> keep fp32.
        w_dtype = jnp.float32 if shrink else jnp.bfloat16
        n_pad = _round_up(n_out, _LANE)
        wt_pad = np.zeros((size_in, n_pad), dtype=np.float32)
        wt_pad[:, :n_out] = weights.T
        weights_t = jnp.asarray(wt_pad, dtype=w_dtype)
        b_row = np.zeros((1, n_pad), dtype=np.float32)
        b_row[0, :n_out] = bias
        bias_row = jnp.asarray(b_row)

        @jax.jit
        def _fwd2d(x2):
            b = x2.shape[0]
            b_pad = _pad_batch(b)
            x2p = jnp.pad(x2, ((0, b_pad - b), (0, 0)))
            out = _matmul_forward(x2p, weights_t, bias_row)
            return out[:b, :n_out]

    def forward(x):
        x = jnp.asarray(x, dtype=jnp.float32)
        squeeze = x.ndim == 1
        x2 = x.reshape(1, -1) if squeeze else x
        out = _fwd2d(x2)
        return out[0] if squeeze else out

    return forward


# ---------------------------------------------------------------------------
# Demo / correctness checks
# ---------------------------------------------------------------------------
if __name__ == "__main__":
    key = jax.random.PRNGKey(0)
    ks = jax.random.split(key, 8)

    # ---- Case 1: non-shrink, C=1 H=8 W=16 -> size_out=128, size_in=256 -----
    C, H, W = 1, 8, 16
    size_out = C * H * W           # 128
    size_in = 2 * H * W            # 256
    image = np.asarray(jax.random.normal(ks[0], (C, H, W), dtype=jnp.float32))
    w_np, b_np = init_weights_bias(size_in, size_out, image)

    fwd_fast = make_occlusion_fourth_layer(size_in, size_out, image)

    # single vector (B=1 -> sublane-padded fast path)
    x1 = jax.random.normal(ks[1], (size_in,), dtype=jnp.float32)
    out1 = jax.block_until_ready(fwd_fast(x1))
    np.testing.assert_allclose(np.asarray(out1), w_np @ np.asarray(x1) + b_np,
                               rtol=1e-5, atol=1e-5)

    # large batch (amortizes launch/DMA; exercises the 1-D parallel batch grid)
    B = 512
    xb = jax.random.normal(ks[2], (B, size_in), dtype=jnp.float32)
    outb = jax.block_until_ready(fwd_fast(xb))
    refb = np.asarray(xb) @ w_np.T + b_np[None, :]
    np.testing.assert_allclose(np.asarray(outb), refb, rtol=1e-5, atol=1e-5)

    # same problem forced through the MXU matmul kernel (bf16 +/-1 weights)
    fwd_mm = make_occlusion_fourth_layer(size_in, size_out, image, force_matmul=True)
    outb_mm = jax.block_until_ready(fwd_mm(xb))
    np.testing.assert_allclose(np.asarray(outb_mm), refb, rtol=1e-4, atol=1e-4)

    # ---- Case 2: non-shrink, C=2 H=8 W=8 (exercises lane padding + tiling) --
    C2, H2, W2 = 2, 8, 8
    size_out2 = C2 * H2 * W2       # 128, but per-channel HW = 64 < 128
    size_in2 = 2 * H2 * W2         # 128
    image2 = np.asarray(jax.random.normal(ks[3], (C2, H2, W2), dtype=jnp.float32))
    w2_np, b2_np = init_weights_bias(size_in2, size_out2, image2)
    fwd2 = make_occlusion_fourth_layer(size_in2, size_out2, image2)
    x2b = jax.random.normal(ks[4], (8, size_in2), dtype=jnp.float32)
    out2 = jax.block_until_ready(fwd2(x2b))
    np.testing.assert_allclose(np.asarray(out2),
                               np.asarray(x2b) @ w2_np.T + b2_np[None, :],
                               rtol=1e-5, atol=1e-5)

    # ---- Case 3: shrink path (dense fp32 weights, d_model=64 -> N padding) --
    d_model = 64
    flw = np.asarray(jax.random.normal(ks[5], (d_model, size_out),
                                       dtype=jnp.float32)) * 0.05
    flb = np.asarray(jax.random.normal(ks[6], (d_model,), dtype=jnp.float32))
    fwd_s = make_occlusion_fourth_layer(size_in, size_out, image,
                                        first_layer_weight=flw,
                                        first_layer_bias=flb, shrink=True)
    w_s = flw @ w_np
    b_s = flb + flw @ b_np
    out_s1 = jax.block_until_ready(fwd_s(x1))
    np.testing.assert_allclose(np.asarray(out_s1), w_s @ np.asarray(x1) + b_s,
                               rtol=1e-4, atol=1e-4)
    out_sb = jax.block_until_ready(fwd_s(xb))   # B=512 -> gridded fp32 matmul
    np.testing.assert_allclose(np.asarray(out_sb),
                               np.asarray(xb) @ w_s.T + b_s[None, :],
                               rtol=1e-4, atol=1e-4)

    print("KERNEL_OK")
</pallas_src>

<mosaic_0001>
module attributes {stable_mosaic.version = 11 : i64} {
  func.func @_structured_kernel(%arg0: memref<8x128xf32, #tpu.memory_space<vmem>>, %arg1: memref<8x128xf32, #tpu.memory_space<vmem>>, %arg2: memref<1x128xf32, #tpu.memory_space<vmem>>, %arg3: memref<8x128xf32, #tpu.memory_space<vmem>>) attributes {dimension_semantics = [], scalar_prefetch = 0 : i64, scratch_operands = 0 : i64, tpu.core_type = #tpu.core_type<tc>} {
    %c0 = arith.constant 0 : index
    %c0_0 = arith.constant 0 : index
    %0 = vector.load %arg0[%c0, %c0_0] : memref<8x128xf32, #tpu.memory_space<vmem>>, vector<8x128xf32>
    %c0_1 = arith.constant 0 : index
    %c0_2 = arith.constant 0 : index
    %1 = vector.load %arg1[%c0_1, %c0_2] : memref<8x128xf32, #tpu.memory_space<vmem>>, vector<8x128xf32>
    %2 = arith.subf %0, %1 : vector<8x128xf32>
    %c0_3 = arith.constant 0 : index
    %c0_4 = arith.constant 0 : index
    %3 = vector.load %arg2[%c0_3, %c0_4] : memref<1x128xf32, #tpu.memory_space<vmem>>, vector<1x128xf32>
    %4 = vector.broadcast %3 : vector<1x128xf32> to vector<8x128xf32>
    %5 = arith.addf %2, %4 : vector<8x128xf32>
    %c0_5 = arith.constant 0 : index
    %c0_6 = arith.constant 0 : index
    %6 = vector.load %arg3[%c0_5, %c0_6] : memref<8x128xf32, #tpu.memory_space<vmem>>, vector<8x128xf32>
    tpu.vector_store %arg3[%c0_5, %c0_6], %5 {strides = array<i32>} : memref<8x128xf32, #tpu.memory_space<vmem>>, vector<8x128xf32>,
    return
  }
}

</mosaic_0001>

<llo_original>
// kernel: _fwd2d.1
$region0: #{_fwd2d.1}
  #allocation0 [shape = 'u32[]', space=smem, size = 0x4, offset = 0x4, fixed_abs, tag = 'smem constant byte address 0x4 - core index']
  #allocation1 [shape = 'u32[72,128]{1,0:T(1,128)}', space=vmem, size = 0x9000, scoped, tag = 'internal scratch']
  %s0 = inlined_call_operand.vmem [shape: f32[8,128], index: 0, kind: input, shape index: {}]
  %s1 = inlined_call_operand.vmem [shape: f32[8,128], index: 1, kind: input, shape index: {}]
  %s2 = inlined_call_operand.vmem [shape: f32[1,128], index: 2, kind: input, shape index: {}]
  %s3 = inlined_call_operand.vmem [shape: f32[8,128], index: 3, kind: output, shape index: {}]
  %s4 = sld [smem:[#allocation0]]
  $region22: #{_fwd2d.1} parent=0
    _
  %s6 = ssub.s32 1, %s4
  %s7 = scalar_select 0, %s6, %s4
  // Predicated region
  $region2: #{_fwd2d.1} parent=0 // pred_check
    _
  $region3: #{_fwd2d.1} parent=0 // pred_check_branch
    %9 = sbr.rel (0) target = $region5
  $region4: #{_fwd2d.1} parent=0 // pred_region
    _
  $region5: #{_fwd2d.1} parent=0 // pred_fallthru
    _
  // Predicated region
  $region6: #{_fwd2d.1} parent=0 // pred_check
    _
  $region7: #{_fwd2d.1} parent=0 // pred_check_branch
    %11 = sbr.rel (0) target = $region9
  $region8: #{_fwd2d.1} parent=0 // pred_region
    _
  $region9: #{_fwd2d.1} parent=0 // pred_fallthru
    _
  // Predicated region
  $region10: #{_fwd2d.1} parent=0 // pred_check
    _
  $region11: #{_fwd2d.1} parent=0 // pred_check_branch
    %13 = sbr.rel (0) target = $region13
  $region12: #{_fwd2d.1} parent=0 // pred_region
    _
  $region13: #{_fwd2d.1} parent=0 // pred_fallthru
    _
  %v14 = vld [vmem:[%s0] sm:$0xff]
  %v15 = vld [vmem:[%s1] sm:$0xff]
  %v16 = vsub.f32 %v14, %v15
  %v17 = vld [vmem:[%s2] sm:$0x1]
  %v19 = vperm.slane %v17, 0
  %v21 = vadd.f32 %v16, %v19
  %22 = vst [vmem:[%s3] sm:$0xff] %v21
  // Predicated region
  $region14: #{_fwd2d.1} parent=0 // pred_check
    _
  $region15: #{_fwd2d.1} parent=0 // pred_check_branch
    %24 = sbr.rel (0) target = $region17
  $region16: #{_fwd2d.1} parent=0 // pred_region
    _
  $region17: #{_fwd2d.1} parent=0 // pred_fallthru
    _
  // Predicated region
  $region18: #{_fwd2d.1} parent=0 // pred_check
    _
  $region19: #{_fwd2d.1} parent=0 // pred_check_branch
    %26 = sbr.rel (0) target = $region21
  $region20: #{_fwd2d.1} parent=0 // pred_region
    _
  $region21: #{_fwd2d.1} parent=0 // pred_fallthru
    _

</llo_original>
